<compile_context>
chip_gen: v7x
topology: tpu7x:2x2x1
jax: 0.10.0
libtpu: 0.0.40
codegen_flags: <defaults>
</compile_context>

<pallas_src>
import functools

import jax
import jax.numpy as jnp
import numpy as np
from jax import lax
from jax.experimental import pallas as pl
from jax.experimental.pallas import tpu as pltpu


# --------------------------------------------------------------------------
# Kernel (feature-major: batch lives on the 128-lane axis)
# --------------------------------------------------------------------------
def _fused_evaluate_kernel(
    state_ref, action_ref,
    w1_ref, b1_ref, w2_ref, b2_ref, w3_ref, b3_ref,
    out_ref,
    *, action_dim: int,
):
    # In-kernel cast to bf16 for MXU operands (f32 accumulation everywhere).
    x = state_ref[...].astype(jnp.bfloat16)        # [TB, OBS]
    act = action_ref[...]                          # [1, TB]  i32, lane-dense

    # Layer 1: h1^T = tanh(W1^T x^T + b1^T), computed by contracting the obs axis
    # of both operands (the q@k^T "NT" pattern — no explicit transpose of x).
    h = jnp.tanh(
        lax.dot_general(w1_ref[...], x, (((1,), (1,)), ((), ())),
                        preferred_element_type=jnp.float32) + b1_ref[...])   # [H2, TB]
    h = jnp.tanh(
        jnp.dot(w2_ref[...], h.astype(jnp.bfloat16),
                preferred_element_type=jnp.float32) + b2_ref[...])           # [H2, TB]
    y = jnp.dot(w3_ref[...], h.astype(jnp.bfloat16),
                preferred_element_type=jnp.float32) + b3_ref[...]            # [A+1, TB]

    logits = y[:action_dim, :]                     # [A, TB]  actor logits
    value = y[action_dim:action_dim + 1, :]        # [1, TB]  critic value

    # Max-shifted softmax over the (small, sublane) action axis; batch is lane-dense.
    m = jnp.max(logits, axis=0, keepdims=True)     # [1, TB]
    z = logits - m
    ez = jnp.exp(z)
    se = jnp.sum(ez, axis=0, keepdims=True)        # [1, TB]
    lse = jnp.log(se)
    inv_se = pl.reciprocal(se, approx=True)        # EUP slot; `probs` never built

    a, tb = logits.shape
    row = lax.broadcasted_iota(jnp.int32, (a, tb), 0)
    z_sel = jnp.sum(jnp.where(row == act, z, 0.0), axis=0, keepdims=True)
    logp_a = z_sel - lse                                               # [1, TB]
    entropy = lse - jnp.sum(ez * z, axis=0, keepdims=True) * inv_se    # [1, TB]

    # Packed lane-dense output: row 0 = logp, row 1 = value, row 2 = entropy.
    out_ref[0:1, :] = logp_a
    out_ref[1:2, :] = value
    out_ref[2:3, :] = entropy
    out_ref[3:8, :] = jnp.zeros((5, tb), jnp.float32)


# --------------------------------------------------------------------------
# Parameter prep (done once, outside the kernel)
# --------------------------------------------------------------------------
def fuse_actor_critic_params(params, action_dim):
    """Fuse actor+critic into one block-diagonal MLP and pre-transpose all weights
    for the feature-major kernel (y^T = W^T @ x^T). Weights -> bf16, biases -> f32
    column vectors."""
    (a_w1, a_b1, a_w2, a_b2, a_w3, a_b3,
     c_w1, c_b1, c_w2, c_b2, c_w3, c_b3) = params
    h_a = a_w1.shape[1]
    h_c = c_w1.shape[1]

    w1_t = jnp.concatenate([a_w1.T, c_w1.T], axis=0)                  # [Ha+Hc, OBS]
    b1_t = jnp.concatenate([a_b1.T, c_b1.T], axis=0)                  # [Ha+Hc, 1]
    w2_t = jnp.block([[a_w2.T, jnp.zeros((h_a, h_c), a_w2.dtype)],
                      [jnp.zeros((h_c, h_a), c_w2.dtype), c_w2.T]])   # [H2, H2]
    b2_t = jnp.concatenate([a_b2.T, c_b2.T], axis=0)                  # [H2, 1]
    w3_t = jnp.block([[a_w3.T, jnp.zeros((action_dim, h_c), a_w3.dtype)],
                      [jnp.zeros((1, h_a), c_w3.dtype), c_w3.T]])     # [A+1, H2]
    b3_t = jnp.concatenate([a_b3.T, c_b3.T], axis=0)                  # [A+1, 1]

    return (w1_t.astype(jnp.bfloat16), b1_t.astype(jnp.float32),
            w2_t.astype(jnp.bfloat16), b2_t.astype(jnp.float32),
            w3_t.astype(jnp.bfloat16), b3_t.astype(jnp.float32))


# --------------------------------------------------------------------------
# Wrapper
# --------------------------------------------------------------------------
def actor_critic_evaluate(state, action, fused_params, action_dim, *, block_b=2048):
    """state: [B, OBS] f32; action: [B] int. Returns (logp [B], values [B,1], entropy [B]).

    block_b: batch tile (must be a multiple of 128 if B > block_b). On v7x prefer
    block_b <= B/2 for large B so the "parallel" grid splits across both TensorCores
    (the default already gives >=2 grid steps whenever B > block_b)."""
    B, obs = state.shape
    if B <= block_b:
        TB = B              # single full-array block: no (8,128) alignment concerns
    else:
        assert block_b % 128 == 0, "block_b must be a multiple of 128"
        TB = block_b        # lane/sublane aligned; ragged last block handled by Pallas
    grid = (pl.cdiv(B, TB),)

    act_row = action.reshape(1, B).astype(jnp.int32)   # lane-dense action stream
    w1t, b1t, w2t, b2t, w3t, b3t = fused_params
    n_h2 = w1t.shape[0]                                # Ha + Hc

    def _const_spec(arr):
        # Full-array block, constant index -> stays VMEM-resident across grid steps.
        return pl.BlockSpec(arr.shape, lambda i: (0, 0))

    kernel = functools.partial(_fused_evaluate_kernel, action_dim=action_dim)

    flops = 2 * B * (obs * n_h2 + n_h2 * n_h2 + n_h2 * (action_dim + 1))
    transcendentals = B * (2 * n_h2 + action_dim + 2)
    bytes_accessed = (B * obs * 4 + B * 4
                      + sum(int(p.size) * p.dtype.itemsize for p in fused_params)
                      + 8 * B * 4)

    out = pl.pallas_call(
        kernel,
        out_shape=jax.ShapeDtypeStruct((8, B), jnp.float32),
        grid_spec=pltpu.PrefetchScalarGridSpec(
            num_scalar_prefetch=0,
            grid=grid,
            in_specs=[
                pl.BlockSpec((TB, obs), lambda i: (i, 0)),   # state rows (f32)
                pl.BlockSpec((1, TB), lambda i: (0, i)),     # actions (lane-dense)
                _const_spec(w1t), _const_spec(b1t),
                _const_spec(w2t), _const_spec(b2t),
                _const_spec(w3t), _const_spec(b3t),
            ],
            out_specs=pl.BlockSpec((8, TB), lambda i: (0, i)),
        ),
        compiler_params=pltpu.CompilerParams(
            dimension_semantics=("parallel",),               # megacore split on v7x
            vmem_limit_bytes=32 * 1024 * 1024,
        ),
        cost_estimate=pl.CostEstimate(
            flops=flops,
            transcendentals=transcendentals,
            bytes_accessed=bytes_accessed,
        ),
    )(state.astype(jnp.float32), act_row, w1t, b1t, w2t, b2t, w3t, b3t)

    logp = out[0, :]
    values = out[1, :][:, None]
    entropy = out[2, :]
    return logp, values, entropy


# --------------------------------------------------------------------------
# Init (mimics torch.nn.Linear default U[-1/sqrt(fan_in), 1/sqrt(fan_in)];
# weights stored as (in, out) == torch weight transposed)
# --------------------------------------------------------------------------
def init_actor_critic_params(key, obs_dim, action_dim, n_hidden_actor=32,
                             n_hidden_critic=32):
    dims = [(obs_dim, n_hidden_actor), (n_hidden_actor, n_hidden_actor),
            (n_hidden_actor, action_dim),
            (obs_dim, n_hidden_critic), (n_hidden_critic, n_hidden_critic),
            (n_hidden_critic, 1)]
    params = []
    for fan_in, fan_out in dims:
        key, kw, kb = jax.random.split(key, 3)
        bound = 1.0 / float(np.sqrt(fan_in))
        w = jax.random.uniform(kw, (fan_in, fan_out), jnp.float32, -bound, bound)
        b = jax.random.uniform(kb, (1, fan_out), jnp.float32, -bound, bound)
        params += [w, b]
    return tuple(params)


def _reference_evaluate(state, action, params, action_dim):
    """Pure-JAX f32 reference of torch evaluate()."""
    (a_w1, a_b1, a_w2, a_b2, a_w3, a_b3,
     c_w1, c_b1, c_w2, c_b2, c_w3, c_b3) = params

    def mlp(x, w1, b1, w2, b2, w3, b3):
        h = jnp.tanh(x @ w1 + b1)
        h = jnp.tanh(h @ w2 + b2)
        return h @ w3 + b3

    logits = mlp(state, a_w1, a_b1, a_w2, a_b2, a_w3, a_b3)
    logp_all = jax.nn.log_softmax(logits, axis=-1)
    logp = jnp.take_along_axis(logp_all, action[:, None].astype(jnp.int32), axis=-1)[:, 0]
    entropy = -jnp.sum(jnp.exp(logp_all) * logp_all, axis=-1)
    values = mlp(state, c_w1, c_b1, c_w2, c_b2, c_w3, c_b3)
    return logp, values, entropy


if __name__ == "__main__":
    # Small shapes consistent with the module: observation_space=16,
    # action_space=4, hidden=32, batch=8.
    B, OBS, ACT, HID = 8, 16, 4, 32

    key = jax.random.PRNGKey(0)
    k_state, k_action, k_params = jax.random.split(key, 3)

    state = jax.random.normal(k_state, (B, OBS), jnp.float32)
    action = jax.random.randint(k_action, (B,), 0, ACT, jnp.int32)
    params = init_actor_critic_params(k_params, OBS, ACT, HID, HID)
    fused = fuse_actor_critic_params(params, ACT)

    logp, values, entropy = actor_critic_evaluate(state, action, fused, ACT)
    jax.block_until_ready((logp, values, entropy))

    # Shapes match torch evaluate() outputs.
    assert logp.shape == (B,)
    assert values.shape == (B, 1)
    assert entropy.shape == (B,)

    # Numerical check vs pure-f32 reference (loose tolerance: bf16 MXU operands).
    r_logp, r_values, r_entropy = _reference_evaluate(state, action, params, ACT)
    assert np.allclose(np.asarray(logp), np.asarray(r_logp), atol=5e-2, rtol=5e-2)
    assert np.allclose(np.asarray(values), np.asarray(r_values), atol=5e-2, rtol=5e-2)
    assert np.allclose(np.asarray(entropy), np.asarray(r_entropy), atol=5e-2, rtol=5e-2)

    # Multi-step grid + ragged last block path (exercises the tiled/v7x split code).
    B2 = 300
    k_s2, k_a2 = jax.random.split(jax.random.PRNGKey(1))
    state2 = jax.random.normal(k_s2, (B2, OBS), jnp.float32)
    action2 = jax.random.randint(k_a2, (B2,), 0, ACT, jnp.int32)
    logp2, values2, entropy2 = actor_critic_evaluate(state2, action2, fused, ACT,
                                                     block_b=128)
    jax.block_until_ready((logp2, values2, entropy2))
    r2_logp, r2_values, r2_entropy = _reference_evaluate(state2, action2, params, ACT)
    assert np.allclose(np.asarray(logp2), np.asarray(r2_logp), atol=5e-2, rtol=5e-2)
    assert np.allclose(np.asarray(values2), np.asarray(r2_values), atol=5e-2, rtol=5e-2)
    assert np.allclose(np.asarray(entropy2), np.asarray(r2_entropy), atol=5e-2, rtol=5e-2)

    # TODO(synk): `act()`'s Categorical.sample() (random multinomial draw) is not
    # implemented in-kernel; only the deterministic evaluate() path is kerneled.
    print("KERNEL_OK")
</pallas_src>

<mosaic_0001>
module attributes {stable_mosaic.version = 11 : i64} {
  func.func @_fused_evaluate_kernel(%arg0: i32, %arg1: memref<8x16xf32, #tpu.memory_space<vmem>>, %arg2: memref<1x8xi32, #tpu.memory_space<vmem>>, %arg3: memref<64x16xbf16, #tpu.memory_space<vmem>>, %arg4: memref<64x1xf32, #tpu.memory_space<vmem>>, %arg5: memref<64x64xbf16, #tpu.memory_space<vmem>>, %arg6: memref<64x1xf32, #tpu.memory_space<vmem>>, %arg7: memref<5x64xbf16, #tpu.memory_space<vmem>>, %arg8: memref<5x1xf32, #tpu.memory_space<vmem>>, %arg9: memref<8x8xf32, #tpu.memory_space<vmem>>) attributes {dimension_semantics = [#tpu.dimension_semantics<parallel>], iteration_bounds = array<i64: 1>, scalar_prefetch = 0 : i64, scratch_operands = 0 : i64, tpu.core_type = #tpu.core_type<tc>, window_params = [{transform_indices = @transform_0, window_bounds = array<i64: 8, 16>}, {transform_indices = @transform_1, window_bounds = array<i64: 1, 8>}, {pipeline_mode = #tpu.pipeline_mode<synchronous>, transform_indices = @transform_2, window_bounds = array<i64: 64, 16>}, {pipeline_mode = #tpu.pipeline_mode<synchronous>, transform_indices = @transform_3, window_bounds = array<i64: 64, 1>}, {pipeline_mode = #tpu.pipeline_mode<synchronous>, transform_indices = @transform_4, window_bounds = array<i64: 64, 64>}, {pipeline_mode = #tpu.pipeline_mode<synchronous>, transform_indices = @transform_5, window_bounds = array<i64: 64, 1>}, {pipeline_mode = #tpu.pipeline_mode<synchronous>, transform_indices = @transform_6, window_bounds = array<i64: 5, 64>}, {pipeline_mode = #tpu.pipeline_mode<synchronous>, transform_indices = @transform_7, window_bounds = array<i64: 5, 1>}, {transform_indices = @transform_8, window_bounds = array<i64: 8, 8>}]} {
    %c0 = arith.constant 0 : index
    %c0_0 = arith.constant 0 : index
    %0 = vector.load %arg1[%c0, %c0_0] : memref<8x16xf32, #tpu.memory_space<vmem>>, vector<8x16xf32>
    %1 = arith.truncf %0 : vector<8x16xf32> to vector<8x16xbf16>
    %c0_1 = arith.constant 0 : index
    %c0_2 = arith.constant 0 : index
    %2 = vector.load %arg2[%c0_1, %c0_2] : memref<1x8xi32, #tpu.memory_space<vmem>>, vector<1x8xi32>
    %c0_3 = arith.constant 0 : index
    %c0_4 = arith.constant 0 : index
    %3 = vector.load %arg3[%c0_3, %c0_4] : memref<64x16xbf16, #tpu.memory_space<vmem>>, vector<64x16xbf16>
    %cst = arith.constant dense<0.000000e+00> : vector<64x8xf32>
    %4 = tpu.matmul %3, %1, %cst {dimension_numbers = #tpu.dot_dimension_numbers<[1], [1], [0], [0], [0, 0, 1, 0], [], []>} : vector<64x16xbf16>, vector<8x16xbf16>, vector<64x8xf32> -> vector<64x8xf32>
    %c0_5 = arith.constant 0 : index
    %c0_6 = arith.constant 0 : index
    %5 = vector.load %arg4[%c0_5, %c0_6] : memref<64x1xf32, #tpu.memory_space<vmem>>, vector<64x1xf32>
    %6 = vector.broadcast %5 : vector<64x1xf32> to vector<64x8xf32>
    %7 = arith.addf %4, %6 : vector<64x8xf32>
    %8 = math.tanh %7 : vector<64x8xf32>
    %c0_7 = arith.constant 0 : index
    %c0_8 = arith.constant 0 : index
    %9 = vector.load %arg5[%c0_7, %c0_8] : memref<64x64xbf16, #tpu.memory_space<vmem>>, vector<64x64xbf16>
    %10 = arith.truncf %8 : vector<64x8xf32> to vector<64x8xbf16>
    %cst_9 = arith.constant dense<0.000000e+00> : vector<64x8xf32>
    %11 = tpu.matmul %9, %10, %cst_9 {dimension_numbers = #tpu.dot_dimension_numbers<[1], [0], [0], [1], [0, 0, 1, 1], [], []>} : vector<64x64xbf16>, vector<64x8xbf16>, vector<64x8xf32> -> vector<64x8xf32>
    %c0_10 = arith.constant 0 : index
    %c0_11 = arith.constant 0 : index
    %12 = vector.load %arg6[%c0_10, %c0_11] : memref<64x1xf32, #tpu.memory_space<vmem>>, vector<64x1xf32>
    %13 = vector.broadcast %12 : vector<64x1xf32> to vector<64x8xf32>
    %14 = arith.addf %11, %13 : vector<64x8xf32>
    %15 = math.tanh %14 : vector<64x8xf32>
    %c0_12 = arith.constant 0 : index
    %c0_13 = arith.constant 0 : index
    %16 = vector.load %arg7[%c0_12, %c0_13] : memref<5x64xbf16, #tpu.memory_space<vmem>>, vector<5x64xbf16>
    %17 = arith.truncf %15 : vector<64x8xf32> to vector<64x8xbf16>
    %cst_14 = arith.constant dense<0.000000e+00> : vector<5x8xf32>
    %18 = tpu.matmul %16, %17, %cst_14 {dimension_numbers = #tpu.dot_dimension_numbers<[1], [0], [0], [1], [0, 0, 1, 1], [], []>} : vector<5x64xbf16>, vector<64x8xbf16>, vector<5x8xf32> -> vector<5x8xf32>
    %c0_15 = arith.constant 0 : index
    %c0_16 = arith.constant 0 : index
    %19 = vector.load %arg8[%c0_15, %c0_16] : memref<5x1xf32, #tpu.memory_space<vmem>>, vector<5x1xf32>
    %20 = vector.broadcast %19 : vector<5x1xf32> to vector<5x8xf32>
    %21 = arith.addf %18, %20 : vector<5x8xf32>
    %22 = vector.extract_strided_slice %21 {offsets = [0, 0], sizes = [4, 8], strides = [1, 1]} : vector<5x8xf32> to vector<4x8xf32>
    %23 = vector.extract_strided_slice %21 {offsets = [4, 0], sizes = [1, 8], strides = [1, 1]} : vector<5x8xf32> to vector<1x8xf32>
    %cst_17 = arith.constant dense<0xFF800000> : vector<8xf32>
    %24 = vector.multi_reduction <maximumf>, %22, %cst_17 [0] : vector<4x8xf32> to vector<8xf32>
    %25 = vector.shape_cast %24 : vector<8xf32> to vector<1x8xf32>
    %26 = vector.broadcast %25 : vector<1x8xf32> to vector<4x8xf32>
    %27 = arith.subf %22, %26 : vector<4x8xf32>
    %28 = math.exp %27 : vector<4x8xf32>
    %cst_18 = arith.constant dense<0.000000e+00> : vector<8xf32>
    %29 = vector.multi_reduction <add>, %28, %cst_18 [0] : vector<4x8xf32> to vector<8xf32>
    %30 = vector.shape_cast %29 : vector<8xf32> to vector<1x8xf32>
    %31 = math.log %30 : vector<1x8xf32>
    %32 = tpu.reciprocal %30 {approx = true} : vector<1x8xf32> -> vector<1x8xf32>
    %33 = tpu.iota {dimensions = array<i32: 0>} : vector<4x8xi32>
    %34 = vector.broadcast %2 : vector<1x8xi32> to vector<4x8xi32>
    %35 = arith.cmpi eq, %33, %34 : vector<4x8xi32>
    %cst_19 = arith.constant 0.000000e+00 : f32
    %36 = vector.broadcast %cst_19 : f32 to vector<4x8xf32>
    %37 = arith.select %35, %27, %36 : vector<4x8xi1>, vector<4x8xf32>
    %cst_20 = arith.constant dense<0.000000e+00> : vector<8xf32>
    %38 = vector.multi_reduction <add>, %37, %cst_20 [0] : vector<4x8xf32> to vector<8xf32>
    %39 = vector.shape_cast %38 : vector<8xf32> to vector<1x8xf32>
    %40 = arith.subf %39, %31 : vector<1x8xf32>
    %41 = arith.mulf %28, %27 : vector<4x8xf32>
    %cst_21 = arith.constant dense<0.000000e+00> : vector<8xf32>
    %42 = vector.multi_reduction <add>, %41, %cst_21 [0] : vector<4x8xf32> to vector<8xf32>
    %43 = vector.shape_cast %42 : vector<8xf32> to vector<1x8xf32>
    %44 = arith.mulf %43, %32 : vector<1x8xf32>
    %45 = arith.subf %31, %44 : vector<1x8xf32>
    %c0_22 = arith.constant 0 : index
    %c0_23 = arith.constant 0 : index
    %46 = vector.load %arg9[%c0_22, %c0_23] : memref<8x8xf32, #tpu.memory_space<vmem>>, vector<1x8xf32>
    tpu.vector_store %arg9[%c0_22, %c0_23], %40 {strides = array<i32>} : memref<8x8xf32, #tpu.memory_space<vmem>>, vector<1x8xf32>,
    %c1 = arith.constant 1 : index
    %c0_24 = arith.constant 0 : index
    %47 = vector.load %arg9[%c1, %c0_24] : memref<8x8xf32, #tpu.memory_space<vmem>>, vector<1x8xf32>
    tpu.vector_store %arg9[%c1, %c0_24], %23 {strides = array<i32>} : memref<8x8xf32, #tpu.memory_space<vmem>>, vector<1x8xf32>,
    %c2 = arith.constant 2 : index
    %c0_25 = arith.constant 0 : index
    %48 = vector.load %arg9[%c2, %c0_25] : memref<8x8xf32, #tpu.memory_space<vmem>>, vector<1x8xf32>
    tpu.vector_store %arg9[%c2, %c0_25], %45 {strides = array<i32>} : memref<8x8xf32, #tpu.memory_space<vmem>>, vector<1x8xf32>,
    %cst_26 = arith.constant 0.000000e+00 : f32
    %49 = vector.broadcast %cst_26 : f32 to vector<5x8xf32>
    %c3 = arith.constant 3 : index
    %c0_27 = arith.constant 0 : index
    %50 = vector.load %arg9[%c3, %c0_27] : memref<8x8xf32, #tpu.memory_space<vmem>>, vector<5x8xf32>
    tpu.vector_store %arg9[%c3, %c0_27], %49 {strides = array<i32>} : memref<8x8xf32, #tpu.memory_space<vmem>>, vector<5x8xf32>,
    return
  }
  func.func @transform_0(%arg0: i32) -> (i32, i32) {
    %c0_i32 = arith.constant 0 : i32
    %c0_i32_0 = arith.constant 0 : i32
    return %arg0, %c0_i32 : i32, i32
  }
  func.func @transform_1(%arg0: i32) -> (i32, i32) {
    %c0_i32 = arith.constant 0 : i32
    %c0_i32_0 = arith.constant 0 : i32
    return %c0_i32, %arg0 : i32, i32
  }
  func.func @transform_2(%arg0: i32) -> (i32, i32) {
    %c0_i32 = arith.constant 0 : i32
    %c0_i32_0 = arith.constant 0 : i32
    %c0_i32_1 = arith.constant 0 : i32
    return %c0_i32, %c0_i32_0 : i32, i32
  }
  func.func @transform_3(%arg0: i32) -> (i32, i32) {
    %c0_i32 = arith.constant 0 : i32
    %c0_i32_0 = arith.constant 0 : i32
    %c0_i32_1 = arith.constant 0 : i32
    return %c0_i32, %c0_i32_0 : i32, i32
  }
  func.func @transform_4(%arg0: i32) -> (i32, i32) {
    %c0_i32 = arith.constant 0 : i32
    %c0_i32_0 = arith.constant 0 : i32
    %c0_i32_1 = arith.constant 0 : i32
    return %c0_i32, %c0_i32_0 : i32, i32
  }
  func.func @transform_5(%arg0: i32) -> (i32, i32) {
    %c0_i32 = arith.constant 0 : i32
    %c0_i32_0 = arith.constant 0 : i32
    %c0_i32_1 = arith.constant 0 : i32
    return %c0_i32, %c0_i32_0 : i32, i32
  }
  func.func @transform_6(%arg0: i32) -> (i32, i32) {
    %c0_i32 = arith.constant 0 : i32
    %c0_i32_0 = arith.constant 0 : i32
    %c0_i32_1 = arith.constant 0 : i32
    return %c0_i32, %c0_i32_0 : i32, i32
  }
  func.func @transform_7(%arg0: i32) -> (i32, i32) {
    %c0_i32 = arith.constant 0 : i32
    %c0_i32_0 = arith.constant 0 : i32
    %c0_i32_1 = arith.constant 0 : i32
    return %c0_i32, %c0_i32_0 : i32, i32
  }
  func.func @transform_8(%arg0: i32) -> (i32, i32) {
    %c0_i32 = arith.constant 0 : i32
    %c0_i32_0 = arith.constant 0 : i32
    return %c0_i32, %arg0 : i32, i32
  }
}

</mosaic_0001>

<llo_original>
// kernel: tpu_custom_call.1
$region0: #{tpu_custom_call.1}
  #allocation0 [shape = 'u32[]', space=smem, size = 0x4, offset = 0x4, fixed_abs, tag = 'smem constant byte address 0x4 - core index']
  #allocation1 [shape = 'u32[144,128]{1,0:T(1,128)}', space=vmem, size = 0x12000, scoped, tag = 'internal scratch']
  %s0 = inlined_call_operand.vmem [shape: f32[8,16], index: 0, kind: input, shape index: {}]
  %s1 = inlined_call_operand.vmem [shape: s32[1,8], index: 1, kind: input, shape index: {}]
  %s2 = inlined_call_operand.vmem [shape: bf16[64,16], index: 2, kind: input, shape index: {}]
  %s3 = inlined_call_operand.vmem [shape: f32[64,1], index: 3, kind: input, shape index: {}]
  %s4 = inlined_call_operand.vmem [shape: bf16[64,64], index: 4, kind: input, shape index: {}]
  %s5 = inlined_call_operand.vmem [shape: f32[64,1], index: 5, kind: input, shape index: {}]
  %s6 = inlined_call_operand.vmem [shape: bf16[5,64], index: 6, kind: input, shape index: {}]
  %s7 = inlined_call_operand.vmem [shape: f32[5,1], index: 7, kind: input, shape index: {}]
  %s8 = inlined_call_operand.hbm [shape: f32[8,8], index: 8, kind: output, shape index: {}]
  %s9 = sld [smem:[#allocation0]]
  $region42: #{tpu_custom_call.1} parent=0
    _
  %s11 = ssub.s32 1, %s9
  %s12 = scalar_select 0, %s11, %s9
  $region1: #{tpu_custom_call.1} parent=0
    #allocation2 [shape = 'u8[4096]{0}', space=vmem, size = 0x1000, scoped, tag = 'output window, operand 0, single buffered']
    #allocation3 [shape = 's32[1]{0}', space=sflag, size = 0x4, scoped, tag = 'scoped memory for tpu_custom_call.1']
    %13 = vsyncpa [#allocation3], 0
    // Predicated region
    $region2: #{tpu_custom_call.1} parent=1 // pred_check
      _
    $region3: #{tpu_custom_call.1} parent=1 // pred_check_branch
      %15 = sbr.rel (0) target = $region5
    $region4: #{tpu_custom_call.1} parent=1 // pred_region
      _
    $region5: #{tpu_custom_call.1} parent=1 // pred_fallthru
      _
    // Predicated region
    $region6: #{tpu_custom_call.1} parent=1 // pred_check
      _
    $region7: #{tpu_custom_call.1} parent=1 // pred_check_branch
      %17 = sbr.rel (0) target = $region9
    $region8: #{tpu_custom_call.1} parent=1 // pred_region
      _
    $region9: #{tpu_custom_call.1} parent=1 // pred_fallthru
      _
    // Predicated region
    $region10: #{tpu_custom_call.1} parent=1 // pred_check
      _
    $region11: #{tpu_custom_call.1} parent=1 // pred_check_branch
      %19 = sbr.rel (0) target = $region13
    $region12: #{tpu_custom_call.1} parent=1 // pred_region
      _
    $region13: #{tpu_custom_call.1} parent=1 // pred_fallthru
      _
    // Predicated region
    $region14: #{tpu_custom_call.1} parent=1 // pred_check
      _
    $region15: #{tpu_custom_call.1} parent=1 // pred_check_branch
      %21 = sbr.rel (0) target = $region17
    $region16: #{tpu_custom_call.1} parent=1 // pred_region
      _
    $region17: #{tpu_custom_call.1} parent=1 // pred_fallthru
      _
    // Predicated region
    $region18: #{tpu_custom_call.1} parent=1 // pred_check
      _
    $region19: #{tpu_custom_call.1} parent=1 // pred_check_branch
      %23 = sbr.rel (0) target = $region21
    $region20: #{tpu_custom_call.1} parent=1 // pred_region
      _
    $region21: #{tpu_custom_call.1} parent=1 // pred_fallthru
      _
    // Predicated region
    $region22: #{tpu_custom_call.1} parent=1 // pred_check
      _
    $region23: #{tpu_custom_call.1} parent=1 // pred_check_branch
      %25 = sbr.rel (0) target = $region25
    $region24: #{tpu_custom_call.1} parent=1 // pred_region
      _
    $region25: #{tpu_custom_call.1} parent=1 // pred_fallthru
      _
    // Predicated region
    $region26: #{tpu_custom_call.1} parent=1 // pred_check
      _
    $region27: #{tpu_custom_call.1} parent=1 // pred_check_branch
      %27 = sbr.rel (0) target = $region29
    $region28: #{tpu_custom_call.1} parent=1 // pred_region
      _
    $region29: #{tpu_custom_call.1} parent=1 // pred_fallthru
      _
    // Predicated region
    $region30: #{tpu_custom_call.1} parent=1 // pred_check
      _
    $region31: #{tpu_custom_call.1} parent=1 // pred_check_branch
      %29 = sbr.rel (0) target = $region33
    $region32: #{tpu_custom_call.1} parent=1 // pred_region
      _
    $region33: #{tpu_custom_call.1} parent=1 // pred_fallthru
      _
    %v31 = vld [vmem:[%s0] sm:$0xff]
    %v32 = vpack.c.bf16 %v31, %v31
    %v33 = vld [vmem:[%s1] sm:$0x1]
    %v34 = vld [vmem:[%s2] sm:$0xf]
    %v35 = vld [vmem:[%s2 + $0x4] sm:$0xf]
    %v36 = vld [vmem:[%s2 + $0x8] sm:$0xf]
    %v37 = vld [vmem:[%s2 + $0xc] sm:$0xf]
    %v38 = vld [vmem:[%s2 + $0x10] sm:$0xf]
    %v39 = vld [vmem:[%s2 + $0x14] sm:$0xf]
    %v40 = vld [vmem:[%s2 + $0x18] sm:$0xf]
    %v41 = vld [vmem:[%s2 + $0x1c] sm:$0xf]
    %v42 = vld [vmem:[%s3] sm:$0xff]
    %v43 = vld [vmem:[%s3 + $0x8] sm:$0xff]
    %v44 = vld [vmem:[%s3 + $0x10] sm:$0xff]
    %v45 = vld [vmem:[%s3 + $0x18] sm:$0xff]
    %v46 = vld [vmem:[%s3 + $0x20] sm:$0xff]
    %v47 = vld [vmem:[%s3 + $0x28] sm:$0xff]
    %v48 = vld [vmem:[%s3 + $0x30] sm:$0xff]
    %v49 = vld [vmem:[%s3 + $0x38] sm:$0xff]
    %51 = vset.pattern.permute.xlu0 0
    %52 = vperm.xlu0 %51, %v42
    %v53 = vpop.permute.xlu0 %52
    %56 = vset.pattern.permute.xlu0 0
    %57 = vperm.xlu0 %56, %v43
    %v58 = vpop.permute.xlu0 %57
    %61 = vset.pattern.permute.xlu0 0
    %62 = vperm.xlu0 %61, %v44
    %v63 = vpop.permute.xlu0 %62
    %66 = vset.pattern.permute.xlu0 0
    %67 = vperm.xlu0 %66, %v45
    %v68 = vpop.permute.xlu0 %67
    %71 = vset.pattern.permute.xlu0 0
    %72 = vperm.xlu0 %71, %v46
    %v73 = vpop.permute.xlu0 %72
    %76 = vset.pattern.permute.xlu0 0
    %77 = vperm.xlu0 %76, %v47
    %v78 = vpop.permute.xlu0 %77
    %81 = vset.pattern.permute.xlu0 0
    %82 = vperm.xlu0 %81, %v48
    %v83 = vpop.permute.xlu0 %82
    %86 = vset.pattern.permute.xlu0 0
    %87 = vperm.xlu0 %86, %v49
    %v88 = vpop.permute.xlu0 %87
    %v98 = vunpack.c.l.b16 %v34
    %v99 = vunpack.c.l.b16 %v35
    %v100 = vunpack.c.l.b16 %v36
    %v101 = vunpack.c.l.b16 %v37
    %v102 = vunpack.c.l.b16 %v38
    %v103 = vunpack.c.l.b16 %v39
    %v104 = vunpack.c.l.b16 %v40
    %v105 = vunpack.c.l.b16 %v41
    %v106 = vpack.c.b16 %v99, %v98
    %v107 = vpack.c.b16 %v101, %v100
    %v108 = vpack.c.b16 %v103, %v102
    %v109 = vpack.c.b16 %v105, %v104
    %vm110 = vcmask 130048
    %v112 = vsel %vm110, %v106, 0
    %v115 = vsel %vm110, %v107, 0
    %v118 = vsel %vm110, %v108, 0
    %v121 = vsel %vm110, %v109, 0
    %v124 = vsel %vm110, %v32, 0
    %126 = vmatprep.subr.bf16.mxu0 0
    %127 = vmatpush1.bf16.xpose.msra.mxu0 %v124
    %128 = vmatprep.subr.bf16.mxu0 0
    %129 = vmatpush1.bf16.xpose.msra.mxu0 0
    %130 = vmatprep.subr.bf16.mxu0 0
    %131 = vmatpush1.bf16.xpose.msra.mxu0 0
    %132 = vmatprep.subr.bf16.mxu0 0
    %133 = vmatpush1.bf16.xpose.msra.mxu0 0
    %134 = vmatprep.subr.bf16.mxu0 0
    %135 = vmatpush1.bf16.xpose.msra.mxu0 0
    %136 = vmatprep.subr.bf16.mxu0 0
    %137 = vmatpush1.bf16.xpose.msra.mxu0 0
    %138 = vmatprep.subr.bf16.mxu0 0
    %139 = vmatpush1.bf16.xpose.msra.mxu0 0
    %140 = vmatprep.subr.bf16.mxu0 0
    %141 = vmatpush1.bf16.xpose.msra.mxu0 0
    %142 = vmatprep.subr.bf16.mxu0 0
    %143 = vmatpush1.bf16.xpose.msra.mxu0 0
    %144 = vmatprep.subr.bf16.mxu0 0
    %145 = vmatpush1.bf16.xpose.msra.mxu0 0
    %146 = vmatprep.subr.bf16.mxu0 0
    %147 = vmatpush1.bf16.xpose.msra.mxu0 0
    %148 = vmatprep.subr.bf16.mxu0 0
    %149 = vmatpush1.bf16.xpose.msra.mxu0 0
    %150 = vmatprep.subr.bf16.mxu0 0
    %151 = vmatpush1.bf16.xpose.msra.mxu0 0
    %152 = vmatprep.subr.bf16.mxu0 0
    %153 = vmatpush1.bf16.xpose.msra.mxu0 0
    %154 = vmatprep.subr.bf16.mxu0 0
    %155 = vmatpush1.bf16.xpose.msra.mxu0 0
    %156 = vmatprep.subr.bf16.mxu0 0
    %157 = vmatpush1.bf16.xpose.msra.mxu0 0
    %158 = vmatprep.mubr.bf16.mxu0 0
    %159 = vmatmul.mubr.bf16.gmra.mrb[0].mxu0 %v112
    %v160 = vpop.f32.mrb[0].mxu0
    %v161 = vadd.f32 %v53, %v160
    %v162 = vpop.f32.mrb[0].mxu0
    %v163 = vpop.f32.mrb[0].mxu0
    %v164 = vadd.f32 %v58, %v163
    %v165 = vpop.f32.mrb[0].mxu0
    %166 = vmatprep.mubr.bf16.mxu0 0
    %167 = vmatmul.mubr.bf16.gmra.mrb[0].mxu0 %v115
    %v168 = vpop.f32.mrb[0].mxu0
    %v169 = vadd.f32 %v63, %v168
    %v170 = vpop.f32.mrb[0].mxu0
    %v171 = vpop.f32.mrb[0].mxu0
    %v172 = vadd.f32 %v68, %v171
    %v173 = vpop.f32.mrb[0].mxu0
    %174 = vmatprep.mubr.bf16.mxu0 0
    %175 = vmatmul.mubr.bf16.gmra.mrb[0].mxu0 %v118
    %v176 = vpop.f32.mrb[0].mxu0
    %v177 = vadd.f32 %v73, %v176
    %v178 = vpop.f32.mrb[0].mxu0
    %v179 = vpop.f32.mrb[0].mxu0
    %v180 = vadd.f32 %v78, %v179
    %v181 = vpop.f32.mrb[0].mxu0
    %182 = vmatprep.mubr.bf16.mxu0 0
    %183 = vmatmul.mubr.bf16.gmra.mrb[0].mxu0 %v121
    %v184 = vpop.f32.mrb[0].mxu0
    %v185 = vadd.f32 %v83, %v184
    %v186 = vpop.f32.mrb[0].mxu0
    %v187 = vpop.f32.mrb[0].mxu0
    %v188 = vadd.f32 %v88, %v187
    %v189 = vpop.f32.mrb[0].mxu0
    %190 = vdwg.mxu0
    %v191 = vtanh.pop %v161
    %v192 = vtanh.pop %v164
    %v193 = vtanh.pop %v169
    %v194 = vtanh.pop %v172
    %v195 = vtanh.pop %v177
    %v196 = vtanh.pop %v180
    %v197 = vtanh.pop %v185
    %v198 = vtanh.pop %v188
    %v199 = vld [vmem:[%s4] sm:$0xf]
    %v200 = vld [vmem:[%s4 + $0x4] sm:$0xf]
    %v201 = vld [vmem:[%s4 + $0x8] sm:$0xf]
    %v202 = vld [vmem:[%s4 + $0xc] sm:$0xf]
    %v203 = vld [vmem:[%s4 + $0x10] sm:$0xf]
    %v204 = vld [vmem:[%s4 + $0x14] sm:$0xf]
    %v205 = vld [vmem:[%s4 + $0x18] sm:$0xf]
    %v206 = vld [vmem:[%s4 + $0x1c] sm:$0xf]
    %v207 = vpack.c.bf16 %v192, %v191
    %v208 = vpack.c.bf16 %v194, %v193
    %v209 = vpack.c.bf16 %v196, %v195
    %v210 = vpack.c.bf16 %v198, %v197
    %v211 = vld [vmem:[%s5] sm:$0xff]
    %v212 = vld [vmem:[%s5 + $0x8] sm:$0xff]
    %v213 = vld [vmem:[%s5 + $0x10] sm:$0xff]
    %v214 = vld [vmem:[%s5 + $0x18] sm:$0xff]
    %v215 = vld [vmem:[%s5 + $0x20] sm:$0xff]
    %v216 = vld [vmem:[%s5 + $0x28] sm:$0xff]
    %v217 = vld [vmem:[%s5 + $0x30] sm:$0xff]
    %v218 = vld [vmem:[%s5 + $0x38] sm:$0xff]
    %220 = vset.pattern.permute.xlu0 0
    %221 = vperm.xlu0 %220, %v211
    %v222 = vpop.permute.xlu0 %221
    %225 = vset.pattern.permute.xlu0 0
    %226 = vperm.xlu0 %225, %v212
    %v227 = vpop.permute.xlu0 %226
    %230 = vset.pattern.permute.xlu0 0
    %231 = vperm.xlu0 %230, %v213
    %v232 = vpop.permute.xlu0 %231
    %235 = vset.pattern.permute.xlu0 0
    %236 = vperm.xlu0 %235, %v214
    %v237 = vpop.permute.xlu0 %236
    %240 = vset.pattern.permute.xlu0 0
    %241 = vperm.xlu0 %240, %v215
    %v242 = vpop.permute.xlu0 %241
    %245 = vset.pattern.permute.xlu0 0
    %246 = vperm.xlu0 %245, %v216
    %v247 = vpop.permute.xlu0 %246
    %250 = vset.pattern.permute.xlu0 0
    %251 = vperm.xlu0 %250, %v217
    %v252 = vpop.permute.xlu0 %251
    %255 = vset.pattern.permute.xlu0 0
    %256 = vperm.xlu0 %255, %v218
    %v257 = vpop.permute.xlu0 %256
    %v267 = vunpack.c.l.b16 %v199
    %v268 = vunpack.c.l.b16 %v200
    %v269 = vunpack.c.l.b16 %v201
    %v270 = vunpack.c.l.b16 %v202
    %v271 = vunpack.c.l.b16 %v203
    %v272 = vunpack.c.l.b16 %v204
    %v273 = vunpack.c.l.b16 %v205
    %v274 = vunpack.c.l.b16 %v206
    %v275 = vpack.c.b16 %v268, %v267
    %v276 = vpack.c.b16 %v270, %v269
    %v277 = vpack.c.b16 %v272, %v271
    %v278 = vpack.c.b16 %v274, %v273
    %vm279 = vcmask 523264
    %v281 = vsel %vm279, %v275, 0
    %v284 = vsel %vm279, %v276, 0
    %v287 = vsel %vm279, %v277, 0
    %v290 = vsel %vm279, %v278, 0
    %292 = vmatprep.subr.bf16.mxu0 0
    %293 = vmatpush1.bf16.msra.mxu0 %v207
    %294 = vmatprep.subr.bf16.mxu0 0
    %295 = vmatpush1.bf16.msra.mxu0 %v208
    %296 = vmatprep.subr.bf16.mxu0 0
    %297 = vmatpush1.bf16.msra.mxu0 %v209
    %298 = vmatprep.subr.bf16.mxu0 0
    %299 = vmatpush1.bf16.msra.mxu0 %v210
    %300 = vmatprep.subr.bf16.mxu0 0
    %301 = vmatpush1.bf16.msra.mxu0 0
    %302 = vmatprep.subr.bf16.mxu0 0
    %303 = vmatpush1.bf16.msra.mxu0 0
    %304 = vmatprep.subr.bf16.mxu0 0
    %305 = vmatpush1.bf16.msra.mxu0 0
    %306 = vmatprep.subr.bf16.mxu0 0
    %307 = vmatpush1.bf16.msra.mxu0 0
    %308 = vmatprep.subr.bf16.mxu0 0
    %309 = vmatpush1.bf16.msra.mxu0 0
    %310 = vmatprep.subr.bf16.mxu0 0
    %311 = vmatpush1.bf16.msra.mxu0 0
    %312 = vmatprep.subr.bf16.mxu0 0
    %313 = vmatpush1.bf16.msra.mxu0 0
    %314 = vmatprep.subr.bf16.mxu0 0
    %315 = vmatpush1.bf16.msra.mxu0 0
    %316 = vmatprep.subr.bf16.mxu0 0
    %317 = vmatpush1.bf16.msra.mxu0 0
    %318 = vmatprep.subr.bf16.mxu0 0
    %319 = vmatpush1.bf16.msra.mxu0 0
    %320 = vmatprep.subr.bf16.mxu0 0
    %321 = vmatpush1.bf16.msra.mxu0 0
    %322 = vmatprep.subr.bf16.mxu0 0
    %323 = vmatpush1.bf16.msra.mxu0 0
    %324 = vmatprep.mubr.bf16.mxu0 0
    %325 = vmatmul.mubr.bf16.gmra.mrb[0].mxu0 %v281
    %v326 = vpop.f32.mrb[0].mxu0
    %v327 = vadd.f32 %v222, %v326
    %v328 = vpop.f32.mrb[0].mxu0
    %v329 = vpop.f32.mrb[0].mxu0
    %v330 = vadd.f32 %v227, %v329
    %v331 = vpop.f32.mrb[0].mxu0
    %332 = vmatprep.mubr.bf16.mxu0 0
    %333 = vmatmul.mubr.bf16.gmra.mrb[0].mxu0 %v284
    %v334 = vpop.f32.mrb[0].mxu0
    %v335 = vadd.f32 %v232, %v334
    %v336 = vpop.f32.mrb[0].mxu0
    %v337 = vpop.f32.mrb[0].mxu0
    %v338 = vadd.f32 %v237, %v337
    %v339 = vpop.f32.mrb[0].mxu0
    %340 = vmatprep.mubr.bf16.mxu0 0
    %341 = vmatmul.mubr.bf16.gmra.mrb[0].mxu0 %v287
    %v342 = vpop.f32.mrb[0].mxu0
    %v343 = vadd.f32 %v242, %v342
    %v344 = vpop.f32.mrb[0].mxu0
    %v345 = vpop.f32.mrb[0].mxu0
    %v346 = vadd.f32 %v247, %v345
    %v347 = vpop.f32.mrb[0].mxu0
    %348 = vmatprep.mubr.bf16.mxu0 0
    %349 = vmatmul.mubr.bf16.gmra.mrb[0].mxu0 %v290
    %v350 = vpop.f32.mrb[0].mxu0
    %v351 = vadd.f32 %v252, %v350
    %v352 = vpop.f32.mrb[0].mxu0
    %v353 = vpop.f32.mrb[0].mxu0
    %v354 = vadd.f32 %v257, %v353
    %v355 = vpop.f32.mrb[0].mxu0
    %356 = vdwg.mxu0
    %v357 = vtanh.pop %v327
    %v358 = vtanh.pop %v330
    %v359 = vtanh.pop %v335
    %v360 = vtanh.pop %v338
    %v361 = vtanh.pop %v343
    %v362 = vtanh.pop %v346
    %v363 = vtanh.pop %v351
    %v364 = vtanh.pop %v354
    %v365 = vld [vmem:[%s6] sm:$0x7]
    %v366 = vpack.c.bf16 %v358, %v357
    %v367 = vpack.c.bf16 %v360, %v359
    %v368 = vpack.c.bf16 %v362, %v361
    %v369 = vpack.c.bf16 %v364, %v363
    %v370 = vld [vmem:[%s7] sm:$0x1f]
    %372 = vset.pattern.permute.xlu0 0
    %373 = vperm.xlu0 %372, %v370
    %v374 = vpop.permute.xlu0 %373
    %v377 = vsel %vm279, %v365, 0
    %379 = vmatprep.subr.bf16.mxu0 0
    %380 = vmatpush1.bf16.msra.mxu0 %v366
    %381 = vmatprep.subr.bf16.mxu0 0
    %382 = vmatpush1.bf16.msra.mxu0 %v367
    %383 = vmatprep.subr.bf16.mxu0 0
    %384 = vmatpush1.bf16.msra.mxu0 %v368
    %385 = vmatprep.subr.bf16.mxu0 0
    %386 = vmatpush1.bf16.msra.mxu0 %v369
    %387 = vmatprep.subr.bf16.mxu0 0
    %388 = vmatpush1.bf16.msra.mxu0 0
    %389 = vmatprep.subr.bf16.mxu0 0
    %390 = vmatpush1.bf16.msra.mxu0 0
    %391 = vmatprep.subr.bf16.mxu0 0
    %392 = vmatpush1.bf16.msra.mxu0 0
    %393 = vmatprep.subr.bf16.mxu0 0
    %394 = vmatpush1.bf16.msra.mxu0 0
    %395 = vmatprep.subr.bf16.mxu0 0
    %396 = vmatpush1.bf16.msra.mxu0 0
    %397 = vmatprep.subr.bf16.mxu0 0
    %398 = vmatpush1.bf16.msra.mxu0 0
    %399 = vmatprep.subr.bf16.mxu0 0
    %400 = vmatpush1.bf16.msra.mxu0 0
    %401 = vmatprep.subr.bf16.mxu0 0
    %402 = vmatpush1.bf16.msra.mxu0 0
    %403 = vmatprep.subr.bf16.mxu0 0
    %404 = vmatpush1.bf16.msra.mxu0 0
    %405 = vmatprep.subr.bf16.mxu0 0
    %406 = vmatpush1.bf16.msra.mxu0 0
    %407 = vmatprep.subr.bf16.mxu0 0
    %408 = vmatpush1.bf16.msra.mxu0 0
    %409 = vmatprep.subr.bf16.mxu0 0
    %410 = vmatpush1.bf16.msra.mxu0 0
    %411 = vmatprep.mubr.bf16.mxu0 0
    %412 = vmatmul.mubr.bf16.gmra.mrb[0].mxu0 %v377
    %v413 = vpop.f32.mrb[0].mxu0
    %v414 = vadd.f32 %v374, %v413
    %v415 = vpop.f32.mrb[0].mxu0
    %v416 = vpop.f32.mrb[0].mxu0
    %v417 = vpop.f32.mrb[0].mxu0
    %418 = vdwg.mxu0
    %vm419 = vcmask 60416
    %v420 = vsel %vm419, %v414, -inf
    %v421 = vrot.slane %v420, 4
    %v422 = vmax.f32 %v420, %v421
    %v423 = vrot.slane %v422, 2
    %v424 = vmax.f32 %v422, %v423
    %v425 = vrot.slane %v424, 1
    %v426 = vmax.f32 %v424, %v425
    %v427 = vsub.f32 %v414, %v426
    %v428 = vmul.f32 %v427, 1.442695
    %v429 = vpow.pop %v428
    %v430 = vsel %vm419, %v429, 0.0
    %v431 = vrot.slane %v430, 4
    %v432 = vadd.f32 %v430, %v431
    %v433 = vrot.slane %v432, 2
    %v434 = vadd.f32 %v432, %v433
    %v435 = vrot.slane %v434, 1
    %v436 = vadd.f32 %v434, %v435
    %v437 = vlog2.pop %v436
    %v438 = vmul.f32 %v437, 0.6931472
    %v439 = vrcp.pop %v436
    %v440 = vlaneseq
    %v441 = vshrl.u32 %v440, 7
    %v442 = vlaneseq
    %v443 = vshrl.u32 %v442, 7
    %v444 = vsub.s32 0, %v443
    %v445 = vrot.slane %v33, %v444
    %vm446 = vcmp.eq.s32.totalorder %v441, %v445
    %v447 = vsel %vm446, %v427, 0.0
    %v448 = vsel %vm419, %v447, 0.0
    %v449 = vrot.slane %v448, 4
    %v450 = vadd.f32 %v448, %v449
    %v451 = vrot.slane %v450, 2
    %v452 = vadd.f32 %v450, %v451
    %v453 = vrot.slane %v452, 1
    %v454 = vadd.f32 %v452, %v453
    %v455 = vsub.f32 %v454, %v438
    %v456 = vmul.f32 %v429, %v427
    %v457 = vsel %vm419, %v456, 0.0
    %v458 = vrot.slane %v457, 4
    %v459 = vadd.f32 %v457, %v458
    %v460 = vrot.slane %v459, 2
    %v461 = vadd.f32 %v459, %v460
    %v462 = vrot.slane %v461, 1
    %v463 = vadd.f32 %v461, %v462
    %v464 = vmul.f32 %v463, %v439
    %v465 = vsub.f32 %v438, %v464
    %vm466 = vcmask 57344
    %467 = vst.msk [vmem:[#allocation2] sm:$0x1] %vm466, %v455
    %vm468 = vcmask 61444
    %469 = vst.msk [vmem:[#allocation2 - $0x3] sm:$0x10] %vm468, %v414
    %470 = vst.msk [vmem:[#allocation2 + $0x2] sm:$0x1] %vm466, %v465
    %vm471 = vcmask 61440
    %472 = vst.msk [vmem:[#allocation2 + $0x3] sm:$0x1f] %vm471, 0.0
    // Predicated region
    $region34: #{tpu_custom_call.1} parent=1 // pred_check
      _
    $region35: #{tpu_custom_call.1} parent=1 // pred_check_branch
      %474 = sbr.rel (0) target = $region37
    $region36: #{tpu_custom_call.1} parent=1 // pred_region
      %s476 = ssub.s32 128, 128
      %477 = vsyncadd [#allocation3], %s476
      %s479 = sshll.u32 [#allocation2], 4
      %s480 = int_to_ptr.vmem [resolvable:$true] %s479
      %482 = dma.vmem_to_hbm [thread:$0]  %s480, 128, %s8, [#allocation3]
    $region37: #{tpu_custom_call.1} parent=1 // pred_fallthru
      _
    // Predicated region
    $region38: #{tpu_custom_call.1} parent=1 // pred_check
      _
    $region39: #{tpu_custom_call.1} parent=1 // pred_check_branch
      %484 = sbr.rel (0) target = $region41
    $region40: #{tpu_custom_call.1} parent=1 // pred_region
      %485 = dma.done [#allocation3], 128
    $region41: #{tpu_custom_call.1} parent=1 // pred_fallthru
      _
    %486 = vsyncpa [#allocation3], 1

</llo_original>
